<compile_context>
chip_gen: v6e
topology: v6e:2x2x1
jax: 0.10.0
libtpu: 0.0.40
codegen_flags: <defaults>
</compile_context>

<pallas_src>
import functools

import jax
import jax.numpy as jnp
from jax.experimental import pallas as pl
from jax.experimental.pallas import tpu as pltpu


def _round_up(x: int, m: int) -> int:
    return ((x + m - 1) // m) * m


def _round_down(x: int, m: int) -> int:
    return (x // m) * m


def _heatmap_loss_kernel(pred_ref, gt_ref, out_ref, *,
                         inv_d: float, d: int, td: int,
                         k_per_split: int, need_mask: bool):
    # pred_ref, gt_ref: (tn, td) input tiles (native dtype) in VMEM
    # out_ref:          (tn, 1) f32, resident across the D (reduction) axis
    k = pl.program_id(2)

    diff = pred_ref[...].astype(jnp.float32) - gt_ref[...].astype(jnp.float32)

    if need_mask:
        # Mask the ragged D tail (and any fully-duplicated clamped tile when
        # the D range is split across two parallel programs).
        s = pl.program_id(0)
        col0 = (s * k_per_split + k) * td
        lane = jax.lax.broadcasted_iota(jnp.int32, diff.shape, 1)
        diff = jnp.where(col0 + lane < d, diff, 0.0)

    partial = jnp.sum(diff * diff, axis=-1, keepdims=True)

    @pl.when(k == 0)
    def _():
        out_ref[...] = jnp.zeros_like(out_ref)

    out_ref[...] += partial

    @pl.when(k == pl.num_programs(2) - 1)
    def _():
        # Single static multiply at finalize (not a per-tile mean).
        out_ref[...] *= inv_d


def heatmap_loss(pred: jax.Array, gt: jax.Array) -> jax.Array:
    """Per-sample MSE over (C, H, W). pred/gt are NCHW; returns shape (N,)."""
    assert pred.shape == gt.shape, (pred.shape, gt.shape)
    n, c, h, w = pred.shape
    d = c * h * w

    pred2 = pred.reshape(n, d)        # contiguous reshape: no HBM copy
    gt2 = gt.reshape(n, d)
    dtype = pred2.dtype
    itemsize = jnp.dtype(dtype).itemsize
    sub = max(8, 32 // max(itemsize, 1))   # sublane pack: 8 f32, 16 bf16, 32 i8

    # ---------- generation-aware block byte budget --------------------------
    try:
        vmem_bytes = int(pltpu.get_tpu_info().vmem_capacity_bytes)
    except Exception:
        vmem_bytes = 64 * 1024 * 1024      # conservative (v7x per-core VMEM)
    # 2 inputs x 2 pipeline buffers x block stays well under every
    # generation's per-core VMEM with this budget.
    block_budget = max(2 * 1024 * 1024, min(8 * 1024 * 1024, vmem_bytes // 12))
    budget_elems = max(block_budget // itemsize, sub * 128)

    # ---------- tile sizes ---------------------------------------------------
    # Lane (D) tile first: long contiguous HBM runs; multiple of 128 or full d.
    tn_min = n if n <= sub else sub
    if d <= 128:
        td = d
    else:
        td_cap = _round_down(d, 128)
        td = max(128, min(td_cap, _round_down(budget_elems // tn_min, 128)))
    k_total = pl.cdiv(d, td)

    # Row (N) tile: multiple of the sublane pack, or the full (small) N.
    if n <= sub:
        tn = n
    else:
        tn_budget = max(sub, _round_down(budget_elems // td, sub))
        tn = min(_round_down(n, sub), tn_budget, 512)
        # v7x megacore: if everything collapsed to a single program and the D
        # axis cannot be split, split the rows instead.
        if pl.cdiv(n, tn) == 1 and k_total == 1:
            tn = max(sub, _round_up(pl.cdiv(n, 2), sub))
    row_tiles = pl.cdiv(n, tn)

    # If the row axis gives no parallelism, split the D reduction across two
    # parallel programs (one per v7x TensorCore); wrapper adds the two halves.
    n_splits = 2 if (row_tiles == 1 and k_total >= 2) else 1
    k_per_split = pl.cdiv(k_total, n_splits)

    need_mask = (d % td != 0) or (n_splits * k_per_split != k_total)

    grid = (n_splits, row_tiles, k_per_split)

    if n_splits == 1:
        def in_idx(s, i, k):
            return (i, k)
    else:
        def in_idx(s, i, k):
            # Clamp the (at most one) overhanging tile; it is fully masked
            # inside the kernel, so re-reading the last tile is harmless.
            return (i, jnp.minimum(s * k_per_split + k, k_total - 1))

    kernel = functools.partial(
        _heatmap_loss_kernel,
        inv_d=1.0 / float(d), d=d, td=td,
        k_per_split=k_per_split, need_mask=need_mask)

    cost = pl.CostEstimate(
        flops=3 * n * d,                                  # sub, mul, add
        transcendentals=0,
        bytes_accessed=2 * n * d * itemsize + n_splits * n * 4,
    )

    vmem_limit = max(32 * 1024 * 1024,
                     min(int(0.75 * vmem_bytes), 100 * 1024 * 1024))

    out = pl.pallas_call(
        kernel,
        out_shape=jax.ShapeDtypeStruct((n_splits, n, 1), jnp.float32),
        grid_spec=pltpu.PrefetchScalarGridSpec(
            num_scalar_prefetch=0,
            grid=grid,
            in_specs=[
                pl.BlockSpec((tn, td), in_idx),
                pl.BlockSpec((tn, td), in_idx),
            ],
            # Output block index ignores k -> stays resident in VMEM across
            # the D reduction; leading None dim is squeezed so the kernel
            # sees a (tn, 1) f32 accumulator.
            out_specs=pl.BlockSpec((None, tn, 1), lambda s, i, k: (s, i, 0)),
        ),
        compiler_params=pltpu.CompilerParams(
            dimension_semantics=("parallel", "parallel", "arbitrary"),
            vmem_limit_bytes=vmem_limit,
        ),
        cost_estimate=cost,
    )(pred2, gt2)

    # Sum the (at most 2) D-split partial means; each already carries 1/D.
    return out[:, :, 0].sum(axis=0)


if __name__ == "__main__":
    key = jax.random.PRNGKey(0)
    k1, k2 = jax.random.split(key)

    N, C, H, W = 2, 4, 16, 16
    pred = jax.random.normal(k1, (N, C, H, W), dtype=jnp.float32)
    gt = jax.random.normal(k2, (N, C, H, W), dtype=jnp.float32)

    loss_fn = jax.jit(heatmap_loss)
    loss = loss_fn(pred, gt)
    jax.block_until_ready(loss)

    # reference check against plain JAX
    ref = jnp.mean((pred - gt) ** 2, axis=(1, 2, 3))
    assert loss.shape == (N,), loss.shape
    assert jnp.allclose(loss, ref, atol=1e-5, rtol=1e-5), (loss, ref)

    print("KERNEL_OK")
</pallas_src>

<mosaic_0001>
module attributes {stable_mosaic.version = 11 : i64} {
  func.func @_heatmap_loss_kernel(%arg0: i32, %arg1: i32, %arg2: i32, %arg3: memref<2x1024xf32, #tpu.memory_space<vmem>>, %arg4: memref<2x1024xf32, #tpu.memory_space<vmem>>, %arg5: memref<1x2x1xf32, #tpu.memory_space<vmem>>) attributes {dimension_semantics = [#tpu.dimension_semantics<parallel>, #tpu.dimension_semantics<parallel>, #tpu.dimension_semantics<arbitrary>], iteration_bounds = array<i64: 1, 1, 1>, scalar_prefetch = 0 : i64, scratch_operands = 0 : i64, tpu.core_type = #tpu.core_type<tc>, window_params = [{transform_indices = @transform_0, window_bounds = array<i64: 2, 1024>}, {transform_indices = @transform_1, window_bounds = array<i64: 2, 1024>}, {transform_indices = @transform_2, window_bounds = array<i64: 1, 2, 1>}]} {
    %c0 = arith.constant 0 : index
    %c0_0 = arith.constant 0 : index
    %0 = vector.load %arg3[%c0, %c0_0] : memref<2x1024xf32, #tpu.memory_space<vmem>>, vector<2x1024xf32>
    %c0_1 = arith.constant 0 : index
    %c0_2 = arith.constant 0 : index
    %1 = vector.load %arg4[%c0_1, %c0_2] : memref<2x1024xf32, #tpu.memory_space<vmem>>, vector<2x1024xf32>
    %2 = arith.subf %0, %1 : vector<2x1024xf32>
    %3 = arith.mulf %2, %2 : vector<2x1024xf32>
    %cst = arith.constant dense<0.000000e+00> : vector<2xf32>
    %4 = vector.multi_reduction <add>, %3, %cst [1] : vector<2x1024xf32> to vector<2xf32>
    %5 = vector.shape_cast %4 : vector<2xf32> to vector<2x1xf32>
    %c0_i32 = arith.constant 0 : i32
    %6 = arith.cmpi eq, %arg2, %c0_i32 : i32
    %7 = arith.extui %6 : i1 to i32
    %c0_i32_3 = arith.constant 0 : i32
    %8 = arith.cmpi ne, %7, %c0_i32_3 : i32
    scf.if %8 {
      %cst_12 = arith.constant 0.000000e+00 : f32
      %18 = vector.broadcast %cst_12 : f32 to vector<2x1xf32>
      %c0_13 = arith.constant 0 : index
      %c0_14 = arith.constant 0 : index
      %c0_15 = arith.constant 0 : index
      %19 = vector.load %arg5[%c0_13, %c0_14, %c0_15] : memref<1x2x1xf32, #tpu.memory_space<vmem>>, vector<1x2x1xf32>
      %20 = vector.shape_cast %19 : vector<1x2x1xf32> to vector<2x1xf32>
      %21 = vector.shape_cast %18 : vector<2x1xf32> to vector<1x2x1xf32>
      tpu.vector_store %arg5[%c0_13, %c0_14, %c0_15], %21 {strides = array<i32>} : memref<1x2x1xf32, #tpu.memory_space<vmem>>, vector<1x2x1xf32>,
    } else {
    }
    %c0_4 = arith.constant 0 : index
    %c0_5 = arith.constant 0 : index
    %c0_6 = arith.constant 0 : index
    %9 = vector.load %arg5[%c0_4, %c0_5, %c0_6] : memref<1x2x1xf32, #tpu.memory_space<vmem>>, vector<1x2x1xf32>
    %10 = vector.shape_cast %9 : vector<1x2x1xf32> to vector<2x1xf32>
    %11 = arith.addf %10, %5 : vector<2x1xf32>
    %c0_7 = arith.constant 0 : index
    %c0_8 = arith.constant 0 : index
    %c0_9 = arith.constant 0 : index
    %12 = vector.load %arg5[%c0_7, %c0_8, %c0_9] : memref<1x2x1xf32, #tpu.memory_space<vmem>>, vector<1x2x1xf32>
    %13 = vector.shape_cast %12 : vector<1x2x1xf32> to vector<2x1xf32>
    %14 = vector.shape_cast %11 : vector<2x1xf32> to vector<1x2x1xf32>
    tpu.vector_store %arg5[%c0_7, %c0_8, %c0_9], %14 {strides = array<i32>} : memref<1x2x1xf32, #tpu.memory_space<vmem>>, vector<1x2x1xf32>,
    %c0_i32_10 = arith.constant 0 : i32
    %15 = arith.cmpi eq, %arg2, %c0_i32_10 : i32
    %16 = arith.extui %15 : i1 to i32
    %c0_i32_11 = arith.constant 0 : i32
    %17 = arith.cmpi ne, %16, %c0_i32_11 : i32
    scf.if %17 {
      %c0_12 = arith.constant 0 : index
      %c0_13 = arith.constant 0 : index
      %c0_14 = arith.constant 0 : index
      %18 = vector.load %arg5[%c0_12, %c0_13, %c0_14] : memref<1x2x1xf32, #tpu.memory_space<vmem>>, vector<1x2x1xf32>
      %19 = vector.shape_cast %18 : vector<1x2x1xf32> to vector<2x1xf32>
      %cst_15 = arith.constant 9.765625E-4 : f32
      %20 = vector.broadcast %cst_15 : f32 to vector<2x1xf32>
      %21 = arith.mulf %19, %20 : vector<2x1xf32>
      %c0_16 = arith.constant 0 : index
      %c0_17 = arith.constant 0 : index
      %c0_18 = arith.constant 0 : index
      %22 = vector.load %arg5[%c0_16, %c0_17, %c0_18] : memref<1x2x1xf32, #tpu.memory_space<vmem>>, vector<1x2x1xf32>
      %23 = vector.shape_cast %22 : vector<1x2x1xf32> to vector<2x1xf32>
      %24 = vector.shape_cast %21 : vector<2x1xf32> to vector<1x2x1xf32>
      tpu.vector_store %arg5[%c0_16, %c0_17, %c0_18], %24 {strides = array<i32>} : memref<1x2x1xf32, #tpu.memory_space<vmem>>, vector<1x2x1xf32>,
    } else {
    }
    return
  }
  func.func @transform_0(%arg0: i32, %arg1: i32, %arg2: i32) -> (i32, i32) {
    %c0_i32 = arith.constant 0 : i32
    return %arg1, %arg2 : i32, i32
  }
  func.func @transform_1(%arg0: i32, %arg1: i32, %arg2: i32) -> (i32, i32) {
    %c0_i32 = arith.constant 0 : i32
    return %arg1, %arg2 : i32, i32
  }
  func.func @transform_2(%arg0: i32, %arg1: i32, %arg2: i32) -> (i32, i32, i32) {
    %c0_i32 = arith.constant 0 : i32
    %c0_i32_0 = arith.constant 0 : i32
    return %arg0, %arg1, %c0_i32 : i32, i32, i32
  }
}

</mosaic_0001>

<llo_original>
// kernel: heatmap_loss.1
$region0: #{heatmap_loss.1}
  #allocation0 [shape = 'u32[]', space=smem, size = 0x4, offset = 0x4, fixed_abs, tag = 'smem constant byte address 0x4 - core index']
  #allocation1 [shape = 'u32[144,128]{1,0:T(1,128)}', space=vmem, size = 0x12000, scoped, tag = 'internal scratch']
  %s0 = inlined_call_operand.vmem [shape: f32[2,1024], index: 0, kind: input, shape index: {}]
  %s1 = inlined_call_operand.vmem [shape: f32[2,1024], index: 1, kind: input, shape index: {}]
  %s2 = inlined_call_operand.vmem [shape: f32[1,2,1], index: 2, kind: output, shape index: {}]
  %s3 = sld [smem:[#allocation0]]
  $region26: #{heatmap_loss.1} parent=0
    _
  %s5 = ssub.s32 1, %s3
  %s6 = scalar_select 0, %s5, %s3
  // Predicated region
  $region2: #{heatmap_loss.1} parent=0 // pred_check
    _
  $region3: #{heatmap_loss.1} parent=0 // pred_check_branch
    %8 = sbr.rel (0) target = $region5
  $region4: #{heatmap_loss.1} parent=0 // pred_region
    _
  $region5: #{heatmap_loss.1} parent=0 // pred_fallthru
    _
  // Predicated region
  $region6: #{heatmap_loss.1} parent=0 // pred_check
    _
  $region7: #{heatmap_loss.1} parent=0 // pred_check_branch
    %10 = sbr.rel (0) target = $region9
  $region8: #{heatmap_loss.1} parent=0 // pred_region
    _
  $region9: #{heatmap_loss.1} parent=0 // pred_fallthru
    _
  %v11 = vld [vmem:[%s0] sm:$0xff]
  %v12 = vld [vmem:[%s0 + $0x8] sm:$0xff]
  %v13 = vld [vmem:[%s1] sm:$0xff]
  %v14 = vld [vmem:[%s1 + $0x8] sm:$0xff]
  %v15 = vsub.f32 %v11, %v13
  %v16 = vsub.f32 %v12, %v14
  %v17 = vmul.f32 %v15, %v15
  %v18 = vmul.f32 %v16, %v16
  %v21 = vcombine.high %v17, %v17
  %v23 = vunpack.c.l.s4 1983009808
  %v24 = vunpack.c.0.s8 %v23
  %v25 = vlaneseq
  %v26 = vshrl.u32 %v25, 7
  %v27 = vsub.s32 %v24, %v26
  %v28 = vrot.slane %v17, %v27
  %v30 = vunpack.c.l.s4 1983009808
  %v31 = vunpack.c.0.s8 %v30
  %v32 = vlaneseq
  %v33 = vshrl.u32 %v32, 7
  %v34 = vsub.s32 %v31, %v33
  %v35 = vrot.slane %v21, %v34
  %v36 = vcombine.high %v28, %v28
  %v37 = vcombine.high %v35, %v35
  %v38 = vcombine.high %v18, %v18
  %v40 = vunpack.c.l.s4 1983009808
  %v41 = vunpack.c.0.s8 %v40
  %v42 = vlaneseq
  %v43 = vshrl.u32 %v42, 7
  %v44 = vsub.s32 %v41, %v43
  %v45 = vrot.slane %v18, %v44
  %v47 = vunpack.c.l.s4 1983009808
  %v48 = vunpack.c.0.s8 %v47
  %v49 = vlaneseq
  %v50 = vshrl.u32 %v49, 7
  %v51 = vsub.s32 %v48, %v50
  %v52 = vrot.slane %v38, %v51
  %v53 = vcombine.high %v45, %v45
  %v54 = vcombine.high %v52, %v52
  %vm63 = vcmask 1041408
  %v64 = vsel %vm63, %v28, 0.0
  %v65 = vsel %vm63, %v36, 0.0
  %v66 = vadd.f32 %v64, %v65
  %v67 = vsel %vm63, %v35, 0.0
  %v68 = vadd.f32 %v66, %v67
  %v69 = vsel %vm63, %v37, 0.0
  %v70 = vadd.f32 %v68, %v69
  %v71 = vsel %vm63, %v45, 0.0
  %v72 = vadd.f32 %v70, %v71
  %v73 = vsel %vm63, %v53, 0.0
  %v74 = vadd.f32 %v72, %v73
  %v75 = vsel %vm63, %v52, 0.0
  %v76 = vadd.f32 %v74, %v75
  %v77 = vsel %vm63, %v54, 0.0
  %v78 = vadd.f32 %v76, %v77
  %79 = vadd.xlane.f32.xlu0 %v78
  %v80 = vpop.xlane.xlu0 %79
  %p81 = scmp.eq.s32.totalorder 0, 0
  // Predicated region
  $region10: #{heatmap_loss.1} parent=0 // pred_check
    %p82 = pneg %p81
  $region11: #{heatmap_loss.1} parent=0 // pred_check_branch
    %84 = sbr.rel (%p82) target = $region13
  $region12: #{heatmap_loss.1} parent=0 // pred_region
    %vm85 = vcmask 1024
    %86 = vst.msk [vmem:[%s2] sm:$0x3] %vm85, 0.0
  $region13: #{heatmap_loss.1} parent=0 // pred_fallthru
    _
  %v87 = vld [vmem:[%s2] sm:$0x3]
  %v88 = vadd.f32 %v87, %v80
  %vm89 = vcmask 1024
  %90 = vst.msk [vmem:[%s2] sm:$0x3] %vm89, %v88
  // Predicated region
  $region14: #{heatmap_loss.1} parent=0 // pred_check
    %p91 = pneg %p81
  $region15: #{heatmap_loss.1} parent=0 // pred_check_branch
    %93 = sbr.rel (%p91) target = $region17
  $region16: #{heatmap_loss.1} parent=0 // pred_region
    %v94 = vld [vmem:[%s2] sm:$0x3]
    %v95 = vmul.f32 %v94, 0.0009765625
    %96 = vst.msk [vmem:[%s2] sm:$0x3] %vm89, %v95
  $region17: #{heatmap_loss.1} parent=0 // pred_fallthru
    _
  // Predicated region
  $region18: #{heatmap_loss.1} parent=0 // pred_check
    _
  $region19: #{heatmap_loss.1} parent=0 // pred_check_branch
    %98 = sbr.rel (0) target = $region21
  $region20: #{heatmap_loss.1} parent=0 // pred_region
    _
  $region21: #{heatmap_loss.1} parent=0 // pred_fallthru
    _
  // Predicated region
  $region22: #{heatmap_loss.1} parent=0 // pred_check
    _
  $region23: #{heatmap_loss.1} parent=0 // pred_check_branch
    %100 = sbr.rel (0) target = $region25
  $region24: #{heatmap_loss.1} parent=0 // pred_region
    _
  $region25: #{heatmap_loss.1} parent=0 // pred_fallthru
    _

</llo_original>
